<compile_context>
chip_gen: v7x
topology: tpu7x:2x2x1
jax: 0.10.0
libtpu: 0.0.40
codegen_flags: <defaults>
</compile_context>

<pallas_src>
import jax
import jax.numpy as jnp
from jax.experimental import pallas as pl
from jax.experimental.pallas import tpu as pltpu

HIDDEN = 200          # logical hidden width (nn.Linear(..., 200))
HIDDEN_PAD = 256      # lane-dense padded hidden width (2 vregs / MXU-friendly)
LANE = 128
BN_EPS = 1e-5


def _round_up(n, m):
    return ((n + m - 1) // m) * m


def _mlp_kernel(x_ref,
                w1_ref, b1_ref, g1_ref, bt1_ref,
                w2_ref, b2_ref, g2_ref, bt2_ref,
                w3_ref, b3_ref,
                o_ref):
    # Weights are bf16 MXU operands; all BN / ReLU math runs in f32.
    x = x_ref[...].astype(jnp.bfloat16)

    def bn_relu(h, g_ref, bt_ref):
        # Training-mode BatchNorm1d: biased statistics over the full batch.
        m = jnp.mean(h, axis=0, keepdims=True)
        v = jnp.maximum(jnp.mean(h * h, axis=0, keepdims=True) - m * m, 0.0)
        h = g_ref[...] * (h - m) * jax.lax.rsqrt(v + BN_EPS) + bt_ref[...]
        return jnp.maximum(h, 0.0)

    # fc1 -> BN -> ReLU   (padded hidden lanes: gamma=beta=0 -> stay exactly 0)
    h1 = jnp.dot(x, w1_ref[...], preferred_element_type=jnp.float32) + b1_ref[...]
    h1 = bn_relu(h1, g1_ref, bt1_ref)

    # fc2 -> BN -> ReLU
    h2 = jnp.dot(h1.astype(jnp.bfloat16), w2_ref[...],
                 preferred_element_type=jnp.float32) + b2_ref[...]
    h2 = bn_relu(h2, g2_ref, bt2_ref)

    # fc3 (lane-dense padded output; padded columns/bias are zero)
    o_ref[...] = (jnp.dot(h2.astype(jnp.bfloat16), w3_ref[...],
                          preferred_element_type=jnp.float32)
                  + b3_ref[...]).astype(o_ref.dtype)


def nonlinear_classifier(x, kparams, out_classes):
    """x: (B, C_in) float32; kparams: padded kernel params from prepare_kernel_params."""
    B, c_in = x.shape
    out_pad = kparams["w3"].shape[1]

    args = (x,
            kparams["w1"], kparams["b1"], kparams["g1"], kparams["bt1"],
            kparams["w2"], kparams["b2"], kparams["g2"], kparams["bt2"],
            kparams["w3"], kparams["b3"])

    vmem = pl.BlockSpec(memory_space=pltpu.MemorySpace.VMEM)

    # Full batch resident so BatchNorm sees true full-batch statistics.
    # Rough VMEM budget: f32 activations + bf16 matmul copies + weights.
    w_bytes = sum(int(a.size * a.dtype.itemsize) for a in args[1:])
    act_bytes = 4 * B * (c_in + 2 * HIDDEN_PAD + out_pad)
    bf16_bytes = 2 * B * (c_in + 2 * HIDDEN_PAD)
    needed = 2 * (act_bytes + bf16_bytes + w_bytes)
    vmem_limit = int(min(max(needed, 32 << 20), 96 << 20))
    # TODO(synk): for batches whose activations exceed VMEM (~64 MiB on v7x),
    # switch to a two-phase batch-tiled grid (accumulate per-feature sum/sumsq
    # over an "arbitrary" axis, then normalize) to keep full-batch BN stats.

    flops = 2 * B * (c_in * HIDDEN_PAD
                     + HIDDEN_PAD * HIDDEN_PAD
                     + HIDDEN_PAD * out_pad)
    bytes_accessed = int(x.size * x.dtype.itemsize) + w_bytes + B * out_pad * 4

    out_padded = pl.pallas_call(
        _mlp_kernel,
        out_shape=jax.ShapeDtypeStruct((B, out_pad), jnp.float32),
        in_specs=[vmem] * len(args),
        out_specs=vmem,
        compiler_params=pltpu.CompilerParams(vmem_limit_bytes=vmem_limit),
        cost_estimate=pl.CostEstimate(flops=flops,
                                      transcendentals=2 * HIDDEN_PAD,
                                      bytes_accessed=bytes_accessed),
    )(*args)
    return out_padded[:, :out_classes]


def init_params(key, in_channels, out_classes):
    """PyTorch-equivalent init: nn.Linear default U(+-1/sqrt(fan_in));
    BatchNorm1d gamma=1, beta=0. Weights stored (in, out)."""
    ks = jax.random.split(key, 6)

    def linear(kw, kb, fan_in, fan_out):
        bound = 1.0 / jnp.sqrt(fan_in)
        w = jax.random.uniform(kw, (fan_in, fan_out), jnp.float32, -bound, bound)
        b = jax.random.uniform(kb, (fan_out,), jnp.float32, -bound, bound)
        return w, b

    w1, b1 = linear(ks[0], ks[1], in_channels, HIDDEN)
    w2, b2 = linear(ks[2], ks[3], HIDDEN, HIDDEN)
    w3, b3 = linear(ks[4], ks[5], HIDDEN, out_classes)
    ones = jnp.ones((HIDDEN,), jnp.float32)
    zeros = jnp.zeros((HIDDEN,), jnp.float32)
    return dict(w1=w1, b1=b1, g1=ones, bt1=zeros,
                w2=w2, b2=b2, g2=ones, bt2=zeros,
                w3=w3, b3=b3)


def prepare_kernel_params(params, out_classes):
    """Pad to lane-dense kernel shapes and cast matmul weights to bf16.
    Padded hidden lanes get zero weights and gamma=beta=0, so they are exactly
    0 after BN+ReLU and contribute nothing to fc2/fc3."""
    out_pad = _round_up(out_classes, LANE)
    c_in = params["w1"].shape[0]

    def pad2(w, rows, cols, dtype):
        r, c = w.shape
        return jnp.pad(w, ((0, rows - r), (0, cols - c))).astype(dtype)

    def pad1(v, cols):
        return jnp.pad(v, (0, cols - v.shape[0])).astype(jnp.float32)[None, :]

    return dict(
        w1=pad2(params["w1"], c_in, HIDDEN_PAD, jnp.bfloat16),
        b1=pad1(params["b1"], HIDDEN_PAD),
        g1=pad1(params["g1"], HIDDEN_PAD),
        bt1=pad1(params["bt1"], HIDDEN_PAD),
        w2=pad2(params["w2"], HIDDEN_PAD, HIDDEN_PAD, jnp.bfloat16),
        b2=pad1(params["b2"], HIDDEN_PAD),
        g2=pad1(params["g2"], HIDDEN_PAD),
        bt2=pad1(params["bt2"], HIDDEN_PAD),
        w3=pad2(params["w3"], HIDDEN_PAD, out_pad, jnp.bfloat16),
        b3=pad1(params["b3"], out_pad),
    )


if __name__ == "__main__":
    key = jax.random.PRNGKey(0)
    k_x, k_p = jax.random.split(key)

    B, in_channels, out_classes = 8, 32, 10
    x = jax.random.normal(k_x, (B, in_channels), jnp.float32)
    params = init_params(k_p, in_channels, out_classes)
    kparams = prepare_kernel_params(params, out_classes)

    out = nonlinear_classifier(x, kparams, out_classes)
    out = jax.block_until_ready(out)
    assert out.shape == (B, out_classes), out.shape
    assert bool(jnp.all(jnp.isfinite(out)))
    print("KERNEL_OK")
</pallas_src>

<mosaic_0001>
module attributes {stable_mosaic.version = 11 : i64} {
  func.func @_mlp_kernel(%arg0: memref<8x32xf32, #tpu.memory_space<vmem>>, %arg1: memref<32x256xbf16, #tpu.memory_space<vmem>>, %arg2: memref<1x256xf32, #tpu.memory_space<vmem>>, %arg3: memref<1x256xf32, #tpu.memory_space<vmem>>, %arg4: memref<1x256xf32, #tpu.memory_space<vmem>>, %arg5: memref<256x256xbf16, #tpu.memory_space<vmem>>, %arg6: memref<1x256xf32, #tpu.memory_space<vmem>>, %arg7: memref<1x256xf32, #tpu.memory_space<vmem>>, %arg8: memref<1x256xf32, #tpu.memory_space<vmem>>, %arg9: memref<256x128xbf16, #tpu.memory_space<vmem>>, %arg10: memref<1x128xf32, #tpu.memory_space<vmem>>, %arg11: memref<8x128xf32, #tpu.memory_space<vmem>>) attributes {dimension_semantics = [], scalar_prefetch = 0 : i64, scratch_operands = 0 : i64, tpu.core_type = #tpu.core_type<tc>} {
    %c0 = arith.constant 0 : index
    %c0_0 = arith.constant 0 : index
    %0 = vector.load %arg0[%c0, %c0_0] : memref<8x32xf32, #tpu.memory_space<vmem>>, vector<8x32xf32>
    %1 = arith.truncf %0 : vector<8x32xf32> to vector<8x32xbf16>
    %c0_1 = arith.constant 0 : index
    %c0_2 = arith.constant 0 : index
    %2 = vector.load %arg1[%c0_1, %c0_2] : memref<32x256xbf16, #tpu.memory_space<vmem>>, vector<32x256xbf16>
    %cst = arith.constant dense<0.000000e+00> : vector<8x256xf32>
    %3 = tpu.matmul %1, %2, %cst {dimension_numbers = #tpu.dot_dimension_numbers<[1], [0], [0], [1], [0, 0, 1, 1], [], []>} : vector<8x32xbf16>, vector<32x256xbf16>, vector<8x256xf32> -> vector<8x256xf32>
    %c0_3 = arith.constant 0 : index
    %c0_4 = arith.constant 0 : index
    %4 = vector.load %arg2[%c0_3, %c0_4] : memref<1x256xf32, #tpu.memory_space<vmem>>, vector<1x256xf32>
    %5 = vector.broadcast %4 : vector<1x256xf32> to vector<8x256xf32>
    %6 = arith.addf %3, %5 : vector<8x256xf32>
    %cst_5 = arith.constant dense<0.000000e+00> : vector<256xf32>
    %7 = vector.multi_reduction <add>, %6, %cst_5 [0] : vector<8x256xf32> to vector<256xf32>
    %8 = vector.shape_cast %7 : vector<256xf32> to vector<1x256xf32>
    %cst_6 = arith.constant 8.000000e+00 : f32
    %9 = vector.broadcast %cst_6 : f32 to vector<1x256xf32>
    %10 = arith.divf %8, %9 : vector<1x256xf32>
    %11 = arith.mulf %6, %6 : vector<8x256xf32>
    %cst_7 = arith.constant dense<0.000000e+00> : vector<256xf32>
    %12 = vector.multi_reduction <add>, %11, %cst_7 [0] : vector<8x256xf32> to vector<256xf32>
    %13 = vector.shape_cast %12 : vector<256xf32> to vector<1x256xf32>
    %cst_8 = arith.constant 8.000000e+00 : f32
    %14 = vector.broadcast %cst_8 : f32 to vector<1x256xf32>
    %15 = arith.divf %13, %14 : vector<1x256xf32>
    %16 = arith.mulf %10, %10 : vector<1x256xf32>
    %17 = arith.subf %15, %16 : vector<1x256xf32>
    %cst_9 = arith.constant 0.000000e+00 : f32
    %18 = vector.broadcast %cst_9 : f32 to vector<1x256xf32>
    %19 = arith.maximumf %17, %18 : vector<1x256xf32>
    %c0_10 = arith.constant 0 : index
    %c0_11 = arith.constant 0 : index
    %20 = vector.load %arg3[%c0_10, %c0_11] : memref<1x256xf32, #tpu.memory_space<vmem>>, vector<1x256xf32>
    %21 = vector.broadcast %10 : vector<1x256xf32> to vector<8x256xf32>
    %22 = arith.subf %6, %21 : vector<8x256xf32>
    %23 = vector.broadcast %20 : vector<1x256xf32> to vector<8x256xf32>
    %24 = arith.mulf %23, %22 : vector<8x256xf32>
    %cst_12 = arith.constant 9.99999974E-6 : f32
    %25 = vector.broadcast %cst_12 : f32 to vector<1x256xf32>
    %26 = arith.addf %19, %25 : vector<1x256xf32>
    %27 = math.rsqrt %26 : vector<1x256xf32>
    %28 = vector.broadcast %27 : vector<1x256xf32> to vector<8x256xf32>
    %29 = arith.mulf %24, %28 : vector<8x256xf32>
    %c0_13 = arith.constant 0 : index
    %c0_14 = arith.constant 0 : index
    %30 = vector.load %arg4[%c0_13, %c0_14] : memref<1x256xf32, #tpu.memory_space<vmem>>, vector<1x256xf32>
    %31 = vector.broadcast %30 : vector<1x256xf32> to vector<8x256xf32>
    %32 = arith.addf %29, %31 : vector<8x256xf32>
    %cst_15 = arith.constant 0.000000e+00 : f32
    %33 = vector.broadcast %cst_15 : f32 to vector<8x256xf32>
    %34 = arith.maximumf %32, %33 : vector<8x256xf32>
    %35 = arith.truncf %34 : vector<8x256xf32> to vector<8x256xbf16>
    %c0_16 = arith.constant 0 : index
    %c0_17 = arith.constant 0 : index
    %36 = vector.load %arg5[%c0_16, %c0_17] : memref<256x256xbf16, #tpu.memory_space<vmem>>, vector<256x256xbf16>
    %cst_18 = arith.constant dense<0.000000e+00> : vector<8x256xf32>
    %37 = tpu.matmul %35, %36, %cst_18 {dimension_numbers = #tpu.dot_dimension_numbers<[1], [0], [0], [1], [0, 0, 1, 1], [], []>} : vector<8x256xbf16>, vector<256x256xbf16>, vector<8x256xf32> -> vector<8x256xf32>
    %c0_19 = arith.constant 0 : index
    %c0_20 = arith.constant 0 : index
    %38 = vector.load %arg6[%c0_19, %c0_20] : memref<1x256xf32, #tpu.memory_space<vmem>>, vector<1x256xf32>
    %39 = vector.broadcast %38 : vector<1x256xf32> to vector<8x256xf32>
    %40 = arith.addf %37, %39 : vector<8x256xf32>
    %cst_21 = arith.constant dense<0.000000e+00> : vector<256xf32>
    %41 = vector.multi_reduction <add>, %40, %cst_21 [0] : vector<8x256xf32> to vector<256xf32>
    %42 = vector.shape_cast %41 : vector<256xf32> to vector<1x256xf32>
    %cst_22 = arith.constant 8.000000e+00 : f32
    %43 = vector.broadcast %cst_22 : f32 to vector<1x256xf32>
    %44 = arith.divf %42, %43 : vector<1x256xf32>
    %45 = arith.mulf %40, %40 : vector<8x256xf32>
    %cst_23 = arith.constant dense<0.000000e+00> : vector<256xf32>
    %46 = vector.multi_reduction <add>, %45, %cst_23 [0] : vector<8x256xf32> to vector<256xf32>
    %47 = vector.shape_cast %46 : vector<256xf32> to vector<1x256xf32>
    %cst_24 = arith.constant 8.000000e+00 : f32
    %48 = vector.broadcast %cst_24 : f32 to vector<1x256xf32>
    %49 = arith.divf %47, %48 : vector<1x256xf32>
    %50 = arith.mulf %44, %44 : vector<1x256xf32>
    %51 = arith.subf %49, %50 : vector<1x256xf32>
    %cst_25 = arith.constant 0.000000e+00 : f32
    %52 = vector.broadcast %cst_25 : f32 to vector<1x256xf32>
    %53 = arith.maximumf %51, %52 : vector<1x256xf32>
    %c0_26 = arith.constant 0 : index
    %c0_27 = arith.constant 0 : index
    %54 = vector.load %arg7[%c0_26, %c0_27] : memref<1x256xf32, #tpu.memory_space<vmem>>, vector<1x256xf32>
    %55 = vector.broadcast %44 : vector<1x256xf32> to vector<8x256xf32>
    %56 = arith.subf %40, %55 : vector<8x256xf32>
    %57 = vector.broadcast %54 : vector<1x256xf32> to vector<8x256xf32>
    %58 = arith.mulf %57, %56 : vector<8x256xf32>
    %cst_28 = arith.constant 9.99999974E-6 : f32
    %59 = vector.broadcast %cst_28 : f32 to vector<1x256xf32>
    %60 = arith.addf %53, %59 : vector<1x256xf32>
    %61 = math.rsqrt %60 : vector<1x256xf32>
    %62 = vector.broadcast %61 : vector<1x256xf32> to vector<8x256xf32>
    %63 = arith.mulf %58, %62 : vector<8x256xf32>
    %c0_29 = arith.constant 0 : index
    %c0_30 = arith.constant 0 : index
    %64 = vector.load %arg8[%c0_29, %c0_30] : memref<1x256xf32, #tpu.memory_space<vmem>>, vector<1x256xf32>
    %65 = vector.broadcast %64 : vector<1x256xf32> to vector<8x256xf32>
    %66 = arith.addf %63, %65 : vector<8x256xf32>
    %cst_31 = arith.constant 0.000000e+00 : f32
    %67 = vector.broadcast %cst_31 : f32 to vector<8x256xf32>
    %68 = arith.maximumf %66, %67 : vector<8x256xf32>
    %69 = arith.truncf %68 : vector<8x256xf32> to vector<8x256xbf16>
    %c0_32 = arith.constant 0 : index
    %c0_33 = arith.constant 0 : index
    %70 = vector.load %arg9[%c0_32, %c0_33] : memref<256x128xbf16, #tpu.memory_space<vmem>>, vector<256x128xbf16>
    %cst_34 = arith.constant dense<0.000000e+00> : vector<8x128xf32>
    %71 = tpu.matmul %69, %70, %cst_34 {dimension_numbers = #tpu.dot_dimension_numbers<[1], [0], [0], [1], [0, 0, 1, 1], [], []>} : vector<8x256xbf16>, vector<256x128xbf16>, vector<8x128xf32> -> vector<8x128xf32>
    %c0_35 = arith.constant 0 : index
    %c0_36 = arith.constant 0 : index
    %72 = vector.load %arg10[%c0_35, %c0_36] : memref<1x128xf32, #tpu.memory_space<vmem>>, vector<1x128xf32>
    %73 = vector.broadcast %72 : vector<1x128xf32> to vector<8x128xf32>
    %74 = arith.addf %71, %73 : vector<8x128xf32>
    %c0_37 = arith.constant 0 : index
    %c0_38 = arith.constant 0 : index
    %75 = vector.load %arg11[%c0_37, %c0_38] : memref<8x128xf32, #tpu.memory_space<vmem>>, vector<8x128xf32>
    tpu.vector_store %arg11[%c0_37, %c0_38], %74 {strides = array<i32>} : memref<8x128xf32, #tpu.memory_space<vmem>>, vector<8x128xf32>,
    return
  }
}

</mosaic_0001>

<llo_original>
// kernel: tpu_custom_call.1
$region0: #{tpu_custom_call.1}
  #allocation0 [shape = 'u32[]', space=smem, size = 0x4, offset = 0x4, fixed_abs, tag = 'smem constant byte address 0x4 - core index']
  #allocation1 [shape = 'u32[144,128]{1,0:T(1,128)}', space=vmem, size = 0x12000, scoped, tag = 'internal scratch']
  %s0 = inlined_call_operand.hbm [shape: f32[8,32], index: 0, kind: input, shape index: {}]
  %s1 = inlined_call_operand.hbm [shape: bf16[32,256], index: 1, kind: input, shape index: {}]
  %s2 = inlined_call_operand.vmem [shape: f32[1,256], index: 2, kind: input, shape index: {}]
  %s3 = inlined_call_operand.vmem [shape: f32[1,256], index: 3, kind: input, shape index: {}]
  %s4 = inlined_call_operand.vmem [shape: f32[1,256], index: 4, kind: input, shape index: {}]
  %s5 = inlined_call_operand.hbm [shape: bf16[256,256], index: 5, kind: input, shape index: {}]
  %s6 = inlined_call_operand.vmem [shape: f32[1,256], index: 6, kind: input, shape index: {}]
  %s7 = inlined_call_operand.vmem [shape: f32[1,256], index: 7, kind: input, shape index: {}]
  %s8 = inlined_call_operand.vmem [shape: f32[1,256], index: 8, kind: input, shape index: {}]
  %s9 = inlined_call_operand.hbm [shape: bf16[256,128], index: 9, kind: input, shape index: {}]
  %s10 = inlined_call_operand.vmem [shape: f32[1,128], index: 10, kind: input, shape index: {}]
  %s11 = inlined_call_operand.hbm [shape: f32[8,128], index: 11, kind: output, shape index: {}]
  %s12 = sld [smem:[#allocation0]]
  $region70: #{tpu_custom_call.1} parent=0
    _
  %s14 = ssub.s32 1, %s12
  %s15 = scalar_select 0, %s14, %s12
  $region1: #{tpu_custom_call.1} parent=0
    #allocation2 [shape = 'u8[4096]{0}', space=vmem, size = 0x1000, scoped, tag = 'input window, operand 0, single buffered']
    #allocation3 [shape = 's32[1]{0}', space=sflag, size = 0x4, scoped, tag = 'scoped memory for tpu_custom_call.1']
    #allocation4 [shape = 's32[1]{0}', space=sflag, size = 0x4, scoped, tag = 'scoped memory for tpu_custom_call.1']
    #allocation5 [shape = 'u8[16384]{0}', space=vmem, size = 0x4000, scoped, tag = 'input window, operand 1, single buffered']
    #allocation6 [shape = 's32[1]{0}', space=sflag, size = 0x4, scoped, tag = 'scoped memory for tpu_custom_call.1']
    #allocation7 [shape = 'u8[131072]{0}', space=vmem, size = 0x20000, scoped, tag = 'input window, operand 5, single buffered']
    #allocation8 [shape = 'u8[65536]{0}', space=vmem, size = 0x10000, scoped, tag = 'input window, operand 9, single buffered']
    #allocation9 [shape = 's32[1]{0}', space=sflag, size = 0x4, scoped, tag = 'scoped memory for tpu_custom_call.1']
    #allocation10 [shape = 'u8[4096]{0}', space=vmem, size = 0x1000, scoped, tag = 'output window, operand 0, single buffered']
    %16 = vsyncpa [#allocation3], 0
    %17 = vsyncpa [#allocation6], 0
    %18 = vsyncpa [#allocation9], 0
    %19 = vsyncpa [#allocation4], 0
    // Predicated region
    $region2: #{tpu_custom_call.1} parent=1 // pred_check
      _
    $region3: #{tpu_custom_call.1} parent=1 // pred_check_branch
      %21 = sbr.rel (0) target = $region5
    $region4: #{tpu_custom_call.1} parent=1 // pred_region
      %s23 = ssub.s32 128, 128
      %24 = vsyncadd [#allocation3], %s23
      %s26 = sshll.u32 [#allocation2], 4
      %s27 = int_to_ptr.vmem [resolvable:$true] %s26
      %29 = dma.hbm_to_vmem [thread:$0]  %s0, 128, %s27, [#allocation3]
    $region5: #{tpu_custom_call.1} parent=1 // pred_fallthru
      _
    // Predicated region
    $region6: #{tpu_custom_call.1} parent=1 // pred_check
      _
    $region7: #{tpu_custom_call.1} parent=1 // pred_check_branch
      %31 = sbr.rel (0) target = $region9
    $region8: #{tpu_custom_call.1} parent=1 // pred_region
      %s33 = ssub.s32 512, 512
      %34 = vsyncadd [#allocation6], %s33
      %s35 = sshll.u32 [#allocation5], 4
      %s36 = int_to_ptr.vmem [resolvable:$true] %s35
      %41 = dma.hbm_to_vmem [thread:$0]  %s1, 512, %s36, [#allocation6], 128, 128, 8
    $region9: #{tpu_custom_call.1} parent=1 // pred_fallthru
      _
    // Predicated region
    $region10: #{tpu_custom_call.1} parent=1 // pred_check
      _
    $region11: #{tpu_custom_call.1} parent=1 // pred_check_branch
      %43 = sbr.rel (0) target = $region13
    $region12: #{tpu_custom_call.1} parent=1 // pred_region
      _
    $region13: #{tpu_custom_call.1} parent=1 // pred_fallthru
      _
    // Predicated region
    $region14: #{tpu_custom_call.1} parent=1 // pred_check
      _
    $region15: #{tpu_custom_call.1} parent=1 // pred_check_branch
      %45 = sbr.rel (0) target = $region17
    $region16: #{tpu_custom_call.1} parent=1 // pred_region
      _
    $region17: #{tpu_custom_call.1} parent=1 // pred_fallthru
      _
    // Predicated region
    $region18: #{tpu_custom_call.1} parent=1 // pred_check
      _
    $region19: #{tpu_custom_call.1} parent=1 // pred_check_branch
      %47 = sbr.rel (0) target = $region21
    $region20: #{tpu_custom_call.1} parent=1 // pred_region
      _
    $region21: #{tpu_custom_call.1} parent=1 // pred_fallthru
      _
    // Predicated region
    $region22: #{tpu_custom_call.1} parent=1 // pred_check
      _
    $region23: #{tpu_custom_call.1} parent=1 // pred_check_branch
      %49 = sbr.rel (0) target = $region25
    $region24: #{tpu_custom_call.1} parent=1 // pred_region
      %s51 = ssub.s32 4096, 4096
      %52 = vsyncadd [#allocation6], %s51
      %s53 = sshll.u32 [#allocation7], 4
      %s54 = int_to_ptr.vmem [resolvable:$true] %s53
      %59 = dma.hbm_to_vmem [thread:$0]  %s5, 4096, %s54, [#allocation6], 128, 128, 8
    $region25: #{tpu_custom_call.1} parent=1 // pred_fallthru
      _
    // Predicated region
    $region26: #{tpu_custom_call.1} parent=1 // pred_check
      _
    $region27: #{tpu_custom_call.1} parent=1 // pred_check_branch
      %61 = sbr.rel (0) target = $region29
    $region28: #{tpu_custom_call.1} parent=1 // pred_region
      _
    $region29: #{tpu_custom_call.1} parent=1 // pred_fallthru
      _
    // Predicated region
    $region30: #{tpu_custom_call.1} parent=1 // pred_check
      _
    $region31: #{tpu_custom_call.1} parent=1 // pred_check_branch
      %63 = sbr.rel (0) target = $region33
    $region32: #{tpu_custom_call.1} parent=1 // pred_region
      _
    $region33: #{tpu_custom_call.1} parent=1 // pred_fallthru
      _
    // Predicated region
    $region34: #{tpu_custom_call.1} parent=1 // pred_check
      _
    $region35: #{tpu_custom_call.1} parent=1 // pred_check_branch
      %65 = sbr.rel (0) target = $region37
    $region36: #{tpu_custom_call.1} parent=1 // pred_region
      _
    $region37: #{tpu_custom_call.1} parent=1 // pred_fallthru
      _
    // Predicated region
    $region38: #{tpu_custom_call.1} parent=1 // pred_check
      _
    $region39: #{tpu_custom_call.1} parent=1 // pred_check_branch
      %67 = sbr.rel (0) target = $region41
    $region40: #{tpu_custom_call.1} parent=1 // pred_region
      %s69 = ssub.s32 2048, 2048
      %70 = vsyncadd [#allocation9], %s69
      %s71 = sshll.u32 [#allocation8], 4
      %s72 = int_to_ptr.vmem [resolvable:$true] %s71
      %77 = dma.hbm_to_vmem [thread:$0]  %s9, 2048, %s72, [#allocation9], 64, 64, 4
    $region41: #{tpu_custom_call.1} parent=1 // pred_fallthru
      _
    // Predicated region
    $region42: #{tpu_custom_call.1} parent=1 // pred_check
      _
    $region43: #{tpu_custom_call.1} parent=1 // pred_check_branch
      %79 = sbr.rel (0) target = $region45
    $region44: #{tpu_custom_call.1} parent=1 // pred_region
      _
    $region45: #{tpu_custom_call.1} parent=1 // pred_fallthru
      _
    // Predicated region
    $region46: #{tpu_custom_call.1} parent=1 // pred_check
      _
    $region47: #{tpu_custom_call.1} parent=1 // pred_check_branch
      %81 = sbr.rel (0) target = $region49
    $region48: #{tpu_custom_call.1} parent=1 // pred_region
      %82 = dma.done [#allocation3], 128
    $region49: #{tpu_custom_call.1} parent=1 // pred_fallthru
      _
    // Predicated region
    $region50: #{tpu_custom_call.1} parent=1 // pred_check
      _
    $region51: #{tpu_custom_call.1} parent=1 // pred_check_branch
      %84 = sbr.rel (0) target = $region53
    $region52: #{tpu_custom_call.1} parent=1 // pred_region
      %85 = dma.done [#allocation6], 512
    $region53: #{tpu_custom_call.1} parent=1 // pred_fallthru
      _
    // Predicated region
    $region54: #{tpu_custom_call.1} parent=1 // pred_check
      _
    $region55: #{tpu_custom_call.1} parent=1 // pred_check_branch
      %87 = sbr.rel (0) target = $region57
    $region56: #{tpu_custom_call.1} parent=1 // pred_region
      %88 = dma.done [#allocation6], 4096
    $region57: #{tpu_custom_call.1} parent=1 // pred_fallthru
      _
    // Predicated region
    $region58: #{tpu_custom_call.1} parent=1 // pred_check
      _
    $region59: #{tpu_custom_call.1} parent=1 // pred_check_branch
      %90 = sbr.rel (0) target = $region61
    $region60: #{tpu_custom_call.1} parent=1 // pred_region
      %91 = dma.done [#allocation9], 2048
    $region61: #{tpu_custom_call.1} parent=1 // pred_fallthru
      _
    %v93 = vld [vmem:[#allocation2] sm:$0xff]
    %v94 = vpack.c.bf16 %v93, %v93
    %v95 = vld [vmem:[#allocation5] sm:$0xff]
    %v96 = vld [vmem:[#allocation5 + $0x8] sm:$0xff]
    %v97 = vld [vmem:[#allocation5 + $0x10] sm:$0xff]
    %v98 = vld [vmem:[#allocation5 + $0x18] sm:$0xff]
    %v99 = vld [vmem:[%s2] sm:$0x3]
    %v101 = vlaneseq
    %v102 = vshrl.u32 %v101, 7
    %v103 = vsub.s32 0, %v102
    %v104 = vrot.slane %v99, %v103
    %v105 = vlaneseq
    %v106 = vshrl.u32 %v105, 7
    %v107 = vsub.s32 1, %v106
    %v108 = vrot.slane %v99, %v107
    %v115 = vunpack.c.l.b16 %v95
    %v116 = vunpack.c.h.b16 %v95
    %v117 = vunpack.c.l.b16 %v96
    %v118 = vunpack.c.h.b16 %v96
    %v119 = vunpack.c.l.b16 %v97
    %v120 = vunpack.c.h.b16 %v97
    %v121 = vunpack.c.l.b16 %v98
    %v122 = vunpack.c.h.b16 %v98
    %v123 = vpack.c.b16 %v117, %v115
    %v124 = vpack.c.b16 %v118, %v116
    %v125 = vpack.c.b16 %v121, %v119
    %v126 = vpack.c.b16 %v122, %v120
    %vm131 = vcmask 261120
    %v133 = vsel %vm131, %v94, 0
    %135 = vmatprep.subr.bf16.mxu0 %v124
    %136 = vmatpush1.bf16.msra.mxu0 %v123
    %137 = vmatprep.subr.bf16.mxu0 %v126
    %138 = vmatpush1.bf16.msra.mxu0 %v125
    %139 = vmatprep.subr.bf16.mxu0 0
    %140 = vmatpush1.bf16.msra.mxu0 0
    %141 = vmatprep.subr.bf16.mxu0 0
    %142 = vmatpush1.bf16.msra.mxu0 0
    %143 = vmatprep.subr.bf16.mxu0 0
    %144 = vmatpush1.bf16.msra.mxu0 0
    %145 = vmatprep.subr.bf16.mxu0 0
    %146 = vmatpush1.bf16.msra.mxu0 0
    %147 = vmatprep.subr.bf16.mxu0 0
    %148 = vmatpush1.bf16.msra.mxu0 0
    %149 = vmatprep.subr.bf16.mxu0 0
    %150 = vmatpush1.bf16.msra.mxu0 0
    %151 = vmatprep.subr.bf16.mxu0 0
    %152 = vmatpush1.bf16.msra.mxu0 0
    %153 = vmatprep.subr.bf16.mxu0 0
    %154 = vmatpush1.bf16.msra.mxu0 0
    %155 = vmatprep.subr.bf16.mxu0 0
    %156 = vmatpush1.bf16.msra.mxu0 0
    %157 = vmatprep.subr.bf16.mxu0 0
    %158 = vmatpush1.bf16.msra.mxu0 0
    %159 = vmatprep.subr.bf16.mxu0 0
    %160 = vmatpush1.bf16.msra.mxu0 0
    %161 = vmatprep.subr.bf16.mxu0 0
    %162 = vmatpush1.bf16.msra.mxu0 0
    %163 = vmatprep.subr.bf16.mxu0 0
    %164 = vmatpush1.bf16.msra.mxu0 0
    %165 = vmatprep.subr.bf16.mxu0 0
    %166 = vmatpush1.bf16.msra.mxu0 0
    %167 = vmatprep.mubr.bf16.mxu0 0
    %168 = vmatmul.mubr.bf16.gmra.mrb[0].mxu0 %v133
    %v169 = vpop.f32.mrb[0].mxu0
    %v170 = vadd.f32 %v104, %v169
    %v171 = vpop.f32.mrb[0].mxu0
    %v172 = vadd.f32 %v108, %v171
    %v173 = vpop.f32.mrb[0].mxu0
    %v174 = vpop.f32.mrb[0].mxu0
    %175 = vdwg.mxu0
    %v176 = vrot.slane %v170, 4
    %v177 = vadd.f32 %v170, %v176
    %v178 = vrot.slane %v177, 2
    %v179 = vadd.f32 %v177, %v178
    %v180 = vrot.slane %v179, 1
    %v181 = vadd.f32 %v179, %v180
    %v182 = vrot.slane %v172, 4
    %v183 = vadd.f32 %v172, %v182
    %v184 = vrot.slane %v183, 2
    %v185 = vadd.f32 %v183, %v184
    %v186 = vrot.slane %v185, 1
    %v187 = vadd.f32 %v185, %v186
    %v188 = vrcp.pop 8.0
    %v189 = vmul.f32 %v181, %v188
    %v190 = vmul.f32 %v187, %v188
    %v191 = vmul.f32 %v170, %v170
    %v192 = vmul.f32 %v172, %v172
    %v193 = vrot.slane %v191, 4
    %v194 = vadd.f32 %v191, %v193
    %v195 = vrot.slane %v194, 2
    %v196 = vadd.f32 %v194, %v195
    %v197 = vrot.slane %v196, 1
    %v198 = vadd.f32 %v196, %v197
    %v199 = vrot.slane %v192, 4
    %v200 = vadd.f32 %v192, %v199
    %v201 = vrot.slane %v200, 2
    %v202 = vadd.f32 %v200, %v201
    %v203 = vrot.slane %v202, 1
    %v204 = vadd.f32 %v202, %v203
    %v205 = vmul.f32 %v198, %v188
    %v206 = vmul.f32 %v204, %v188
    %v207 = vmul.f32 %v189, %v189
    %v208 = vmul.f32 %v190, %v190
    %v209 = vsub.f32 %v205, %v207
    %v210 = vsub.f32 %v206, %v208
    %v211 = vmax.f32 %v209, 0.0
    %v212 = vmax.f32 %v210, 0.0
    %v213 = vld [vmem:[%s3] sm:$0x3]
    %v214 = vsub.f32 %v170, %v189
    %v215 = vsub.f32 %v172, %v190
    %v217 = vlaneseq
    %v218 = vshrl.u32 %v217, 7
    %v219 = vsub.s32 0, %v218
    %v220 = vrot.slane %v213, %v219
    %v221 = vlaneseq
    %v222 = vshrl.u32 %v221, 7
    %v223 = vsub.s32 1, %v222
    %v224 = vrot.slane %v213, %v223
    %v227 = vmul.f32 %v220, %v214
    %v228 = vmul.f32 %v224, %v215
    %v229 = vadd.f32 %v211, 1e-05
    %v230 = vadd.f32 %v212, 1e-05
    %v231 = vrsqrt.pop %v229
    %v232 = vrsqrt.pop %v230
    %v233 = vmul.f32 %v227, %v231
    %v234 = vmul.f32 %v228, %v232
    %v235 = vld [vmem:[%s4] sm:$0x3]
    %v237 = vlaneseq
    %v238 = vshrl.u32 %v237, 7
    %v239 = vsub.s32 0, %v238
    %v240 = vrot.slane %v235, %v239
    %v241 = vlaneseq
    %v242 = vshrl.u32 %v241, 7
    %v243 = vsub.s32 1, %v242
    %v244 = vrot.slane %v235, %v243
    %v247 = vadd.f32 %v233, %v240
    %v248 = vadd.f32 %v234, %v244
    %v249 = vmax.f32 %v247, 0.0
    %v250 = vmax.f32 %v248, 0.0
    %v251 = vpack.c.bf16 %v249, %v249
    %v252 = vpack.c.bf16 %v250, %v250
    %v253 = vld [vmem:[#allocation7] sm:$0xff]
    %v254 = vld [vmem:[#allocation7 + $0x8] sm:$0xff]
    %v255 = vld [vmem:[#allocation7 + $0x10] sm:$0xff]
    %v256 = vld [vmem:[#allocation7 + $0x18] sm:$0xff]
    %v257 = vld [vmem:[#allocation7 + $0x20] sm:$0xff]
    %v258 = vld [vmem:[#allocation7 + $0x28] sm:$0xff]
    %v259 = vld [vmem:[#allocation7 + $0x30] sm:$0xff]
    %v260 = vld [vmem:[#allocation7 + $0x38] sm:$0xff]
    %v261 = vld [vmem:[#allocation7 + $0x40] sm:$0xff]
    %v262 = vld [vmem:[#allocation7 + $0x48] sm:$0xff]
    %v263 = vld [vmem:[#allocation7 + $0x50] sm:$0xff]
    %v264 = vld [vmem:[#allocation7 + $0x58] sm:$0xff]
    %v265 = vld [vmem:[#allocation7 + $0x60] sm:$0xff]
    %v266 = vld [vmem:[#allocation7 + $0x68] sm:$0xff]
    %v267 = vld [vmem:[#allocation7 + $0x70] sm:$0xff]
    %v268 = vld [vmem:[#allocation7 + $0x78] sm:$0xff]
    %v269 = vld [vmem:[#allocation7 + $0x80] sm:$0xff]
    %v270 = vld [vmem:[#allocation7 + $0x88] sm:$0xff]
    %v271 = vld [vmem:[#allocation7 + $0x90] sm:$0xff]
    %v272 = vld [vmem:[#allocation7 + $0x98] sm:$0xff]
    %v273 = vld [vmem:[#allocation7 + $0xa0] sm:$0xff]
    %v274 = vld [vmem:[#allocation7 + $0xa8] sm:$0xff]
    %v275 = vld [vmem:[#allocation7 + $0xb0] sm:$0xff]
    %v276 = vld [vmem:[#allocation7 + $0xb8] sm:$0xff]
    %v277 = vld [vmem:[#allocation7 + $0xc0] sm:$0xff]
    %v278 = vld [vmem:[#allocation7 + $0xc8] sm:$0xff]
    %v279 = vld [vmem:[#allocation7 + $0xd0] sm:$0xff]
    %v280 = vld [vmem:[#allocation7 + $0xd8] sm:$0xff]
    %v281 = vld [vmem:[#allocation7 + $0xe0] sm:$0xff]
    %v282 = vld [vmem:[#allocation7 + $0xe8] sm:$0xff]
    %v283 = vld [vmem:[#allocation7 + $0xf0] sm:$0xff]
    %v284 = vld [vmem:[#allocation7 + $0xf8] sm:$0xff]
    %v285 = vld [vmem:[%s6] sm:$0x3]
    %v287 = vlaneseq
    %v288 = vshrl.u32 %v287, 7
    %v289 = vsub.s32 0, %v288
    %v290 = vrot.slane %v285, %v289
    %v291 = vlaneseq
    %v292 = vshrl.u32 %v291, 7
    %v293 = vsub.s32 1, %v292
    %v294 = vrot.slane %v285, %v293
    %v329 = vunpack.c.l.b16 %v253
    %v330 = vunpack.c.h.b16 %v253
    %v331 = vunpack.c.l.b16 %v254
    %v332 = vunpack.c.h.b16 %v254
    %v333 = vunpack.c.l.b16 %v255
    %v334 = vunpack.c.h.b16 %v255
    %v335 = vunpack.c.l.b16 %v256
    %v336 = vunpack.c.h.b16 %v256
    %v337 = vunpack.c.l.b16 %v257
    %v338 = vunpack.c.h.b16 %v257
    %v339 = vunpack.c.l.b16 %v258
    %v340 = vunpack.c.h.b16 %v258
    %v341 = vunpack.c.l.b16 %v259
    %v342 = vunpack.c.h.b16 %v259
    %v343 = vunpack.c.l.b16 %v260
    %v344 = vunpack.c.h.b16 %v260
    %v345 = vunpack.c.l.b16 %v261
    %v346 = vunpack.c.h.b16 %v261
    %v347 = vunpack.c.l.b16 %v262
    %v348 = vunpack.c.h.b16 %v262
    %v349 = vunpack.c.l.b16 %v263
    %v350 = vunpack.c.h.b16 %v263
    %v351 = vunpack.c.l.b16 %v264
    %v352 = vunpack.c.h.b16 %v264
    %v353 = vunpack.c.l.b16 %v265
    %v354 = vunpack.c.h.b16 %v265
    %v355 = vunpack.c.l.b16 %v266
    %v356 = vunpack.c.h.b16 %v266
    %v357 = vunpack.c.l.b16 %v267
    %v358 = vunpack.c.h.b16 %v267
    %v359 = vunpack.c.l.b16 %v268
    %v360 = vunpack.c.h.b16 %v268
    %v361 = vunpack.c.l.b16 %v269
    %v362 = vunpack.c.h.b16 %v269
    %v363 = vunpack.c.l.b16 %v270
    %v364 = vunpack.c.h.b16 %v270
    %v365 = vunpack.c.l.b16 %v271
    %v366 = vunpack.c.h.b16 %v271
    %v367 = vunpack.c.l.b16 %v272
    %v368 = vunpack.c.h.b16 %v272
    %v369 = vunpack.c.l.b16 %v273
    %v370 = vunpack.c.h.b16 %v273
    %v371 = vunpack.c.l.b16 %v274
    %v372 = vunpack.c.h.b16 %v274
    %v373 = vunpack.c.l.b16 %v275
    %v374 = vunpack.c.h.b16 %v275
    %v375 = vunpack.c.l.b16 %v276
    %v376 = vunpack.c.h.b16 %v276
    %v377 = vunpack.c.l.b16 %v277
    %v378 = vunpack.c.h.b16 %v277
    %v379 = vunpack.c.l.b16 %v278
    %v380 = vunpack.c.h.b16 %v278
    %v381 = vunpack.c.l.b16 %v279
    %v382 = vunpack.c.h.b16 %v279
    %v383 = vunpack.c.l.b16 %v280
    %v384 = vunpack.c.h.b16 %v280
    %v385 = vunpack.c.l.b16 %v281
    %v386 = vunpack.c.h.b16 %v281
    %v387 = vunpack.c.l.b16 %v282
    %v388 = vunpack.c.h.b16 %v282
    %v389 = vunpack.c.l.b16 %v283
    %v390 = vunpack.c.h.b16 %v283
    %v391 = vunpack.c.l.b16 %v284
    %v392 = vunpack.c.h.b16 %v284
    %v393 = vpack.c.b16 %v331, %v329
    %v394 = vpack.c.b16 %v332, %v330
    %v395 = vpack.c.b16 %v335, %v333
    %v396 = vpack.c.b16 %v336, %v334
    %v397 = vpack.c.b16 %v339, %v337
    %v398 = vpack.c.b16 %v340, %v338
    %v399 = vpack.c.b16 %v343, %v341
    %v400 = vpack.c.b16 %v344, %v342
    %v401 = vpack.c.b16 %v347, %v345
    %v402 = vpack.c.b16 %v348, %v346
    %v403 = vpack.c.b16 %v351, %v349
    %v404 = vpack.c.b16 %v352, %v350
    %v405 = vpack.c.b16 %v355, %v353
    %v406 = vpack.c.b16 %v356, %v354
    %v407 = vpack.c.b16 %v359, %v357
    %v408 = vpack.c.b16 %v360, %v358
    %v409 = vpack.c.b16 %v363, %v361
    %v410 = vpack.c.b16 %v364, %v362
    %v411 = vpack.c.b16 %v367, %v365
    %v412 = vpack.c.b16 %v368, %v366
    %v413 = vpack.c.b16 %v371, %v369
    %v414 = vpack.c.b16 %v372, %v370
    %v415 = vpack.c.b16 %v375, %v373
    %v416 = vpack.c.b16 %v376, %v374
    %v417 = vpack.c.b16 %v379, %v377
    %v418 = vpack.c.b16 %v380, %v378
    %v419 = vpack.c.b16 %v383, %v381
    %v420 = vpack.c.b16 %v384, %v382
    %v421 = vpack.c.b16 %v387, %v385
    %v422 = vpack.c.b16 %v388, %v386
    %v423 = vpack.c.b16 %v391, %v389
    %v424 = vpack.c.b16 %v392, %v390
    %457 = vmatprep.subr.bf16.mxu0 %v394
    %458 = vmatpush1.bf16.msra.mxu0 %v393
    %459 = vmatprep.subr.bf16.mxu0 %v396
    %460 = vmatpush1.bf16.msra.mxu0 %v395
    %461 = vmatprep.subr.bf16.mxu0 %v398
    %462 = vmatpush1.bf16.msra.mxu0 %v397
    %463 = vmatprep.subr.bf16.mxu0 %v400
    %464 = vmatpush1.bf16.msra.mxu0 %v399
    %465 = vmatprep.subr.bf16.mxu0 %v402
    %466 = vmatpush1.bf16.msra.mxu0 %v401
    %467 = vmatprep.subr.bf16.mxu0 %v404
    %468 = vmatpush1.bf16.msra.mxu0 %v403
    %469 = vmatprep.subr.bf16.mxu0 %v406
    %470 = vmatpush1.bf16.msra.mxu0 %v405
    %471 = vmatprep.subr.bf16.mxu0 %v408
    %472 = vmatpush1.bf16.msra.mxu0 %v407
    %473 = vmatprep.subr.bf16.mxu0 %v410
    %474 = vmatpush1.bf16.msra.mxu0 %v409
    %475 = vmatprep.subr.bf16.mxu0 %v412
    %476 = vmatpush1.bf16.msra.mxu0 %v411
    %477 = vmatprep.subr.bf16.mxu0 %v414
    %478 = vmatpush1.bf16.msra.mxu0 %v413
    %479 = vmatprep.subr.bf16.mxu0 %v416
    %480 = vmatpush1.bf16.msra.mxu0 %v415
    %481 = vmatprep.subr.bf16.mxu0 %v418
    %482 = vmatpush1.bf16.msra.mxu0 %v417
    %483 = vmatprep.subr.bf16.mxu0 %v420
    %484 = vmatpush1.bf16.msra.mxu0 %v419
    %485 = vmatprep.subr.bf16.mxu0 %v422
    %486 = vmatpush1.bf16.msra.mxu0 %v421
    %487 = vmatprep.subr.bf16.mxu0 %v424
    %488 = vmatpush1.bf16.msra.mxu0 %v423
    %489 = vmatprep.mubr.bf16.mxu0 %v252
    %490 = vmatmul.mubr.bf16.gmra.mrb[0].mxu0 %v251
    %v491 = vpop.f32.mrb[0].mxu0
    %v492 = vadd.f32 %v290, %v491
    %v493 = vpop.f32.mrb[0].mxu0
    %v494 = vadd.f32 %v294, %v493
    %v495 = vpop.f32.mrb[0].mxu0
    %v496 = vpop.f32.mrb[0].mxu0
    %497 = vdwg.mxu0
    %v498 = vrot.slane %v492, 4
    %v499 = vadd.f32 %v492, %v498
    %v500 = vrot.slane %v499, 2
    %v501 = vadd.f32 %v499, %v500
    %v502 = vrot.slane %v501, 1
    %v503 = vadd.f32 %v501, %v502
    %v504 = vrot.slane %v494, 4
    %v505 = vadd.f32 %v494, %v504
    %v506 = vrot.slane %v505, 2
    %v507 = vadd.f32 %v505, %v506
    %v508 = vrot.slane %v507, 1
    %v509 = vadd.f32 %v507, %v508
    %v510 = vmul.f32 %v503, %v188
    %v511 = vmul.f32 %v509, %v188
    %v512 = vmul.f32 %v492, %v492
    %v513 = vmul.f32 %v494, %v494
    %v514 = vrot.slane %v512, 4
    %v515 = vadd.f32 %v512, %v514
    %v516 = vrot.slane %v515, 2
    %v517 = vadd.f32 %v515, %v516
    %v518 = vrot.slane %v517, 1
    %v519 = vadd.f32 %v517, %v518
    %v520 = vrot.slane %v513, 4
    %v521 = vadd.f32 %v513, %v520
    %v522 = vrot.slane %v521, 2
    %v523 = vadd.f32 %v521, %v522
    %v524 = vrot.slane %v523, 1
    %v525 = vadd.f32 %v523, %v524
    %v526 = vmul.f32 %v519, %v188
    %v527 = vmul.f32 %v525, %v188
    %v528 = vmul.f32 %v510, %v510
    %v529 = vmul.f32 %v511, %v511
    %v530 = vsub.f32 %v526, %v528
    %v531 = vsub.f32 %v527, %v529
    %v532 = vmax.f32 %v530, 0.0
    %v533 = vmax.f32 %v531, 0.0
    %v534 = vld [vmem:[%s7] sm:$0x3]
    %v535 = vsub.f32 %v492, %v510
    %v536 = vsub.f32 %v494, %v511
    %v538 = vlaneseq
    %v539 = vshrl.u32 %v538, 7
    %v540 = vsub.s32 0, %v539
    %v541 = vrot.slane %v534, %v540
    %v542 = vlaneseq
    %v543 = vshrl.u32 %v542, 7
    %v544 = vsub.s32 1, %v543
    %v545 = vrot.slane %v534, %v544
    %v548 = vmul.f32 %v541, %v535
    %v549 = vmul.f32 %v545, %v536
    %v550 = vadd.f32 %v532, 1e-05
    %v551 = vadd.f32 %v533, 1e-05
    %v552 = vrsqrt.pop %v550
    %v553 = vrsqrt.pop %v551
    %v554 = vmul.f32 %v548, %v552
    %v555 = vmul.f32 %v549, %v553
    %v556 = vld [vmem:[%s8] sm:$0x3]
    %v558 = vlaneseq
    %v559 = vshrl.u32 %v558, 7
    %v560 = vsub.s32 0, %v559
    %v561 = vrot.slane %v556, %v560
    %v562 = vlaneseq
    %v563 = vshrl.u32 %v562, 7
    %v564 = vsub.s32 1, %v563
    %v565 = vrot.slane %v556, %v564
    %v568 = vadd.f32 %v554, %v561
    %v569 = vadd.f32 %v555, %v565
    %v570 = vmax.f32 %v568, 0.0
    %v571 = vmax.f32 %v569, 0.0
    %v572 = vpack.c.bf16 %v570, %v570
    %v573 = vpack.c.bf16 %v571, %v571
    %v574 = vld [vmem:[#allocation8] sm:$0xf]
    %v575 = vld [vmem:[#allocation8 + $0x4] sm:$0xf]
    %v576 = vld [vmem:[#allocation8 + $0x8] sm:$0xf]
    %v577 = vld [vmem:[#allocation8 + $0xc] sm:$0xf]
    %v578 = vld [vmem:[#allocation8 + $0x10] sm:$0xf]
    %v579 = vld [vmem:[#allocation8 + $0x14] sm:$0xf]
    %v580 = vld [vmem:[#allocation8 + $0x18] sm:$0xf]
    %v581 = vld [vmem:[#allocation8 + $0x1c] sm:$0xf]
    %v582 = vld [vmem:[#allocation8 + $0x20] sm:$0xf]
    %v583 = vld [vmem:[#allocation8 + $0x24] sm:$0xf]
    %v584 = vld [vmem:[#allocation8 + $0x28] sm:$0xf]
    %v585 = vld [vmem:[#allocation8 + $0x2c] sm:$0xf]
    %v586 = vld [vmem:[#allocation8 + $0x30] sm:$0xf]
    %v587 = vld [vmem:[#allocation8 + $0x34] sm:$0xf]
    %v588 = vld [vmem:[#allocation8 + $0x38] sm:$0xf]
    %v589 = vld [vmem:[#allocation8 + $0x3c] sm:$0xf]
    %v590 = vld [vmem:[#allocation8 + $0x40] sm:$0xf]
    %v591 = vld [vmem:[#allocation8 + $0x44] sm:$0xf]
    %v592 = vld [vmem:[#allocation8 + $0x48] sm:$0xf]
    %v593 = vld [vmem:[#allocation8 + $0x4c] sm:$0xf]
    %v594 = vld [vmem:[#allocation8 + $0x50] sm:$0xf]
    %v595 = vld [vmem:[#allocation8 + $0x54] sm:$0xf]
    %v596 = vld [vmem:[#allocation8 + $0x58] sm:$0xf]
    %v597 = vld [vmem:[#allocation8 + $0x5c] sm:$0xf]
    %v598 = vld [vmem:[#allocation8 + $0x60] sm:$0xf]
    %v599 = vld [vmem:[#allocation8 + $0x64] sm:$0xf]
    %v600 = vld [vmem:[#allocation8 + $0x68] sm:$0xf]
    %v601 = vld [vmem:[#allocation8 + $0x6c] sm:$0xf]
    %v602 = vld [vmem:[#allocation8 + $0x70] sm:$0xf]
    %v603 = vld [vmem:[#allocation8 + $0x74] sm:$0xf]
    %v604 = vld [vmem:[#allocation8 + $0x78] sm:$0xf]
    %v605 = vld [vmem:[#allocation8 + $0x7c] sm:$0xf]
    %v606 = vld [vmem:[%s10] sm:$0x1]
    %v608 = vlaneseq
    %v609 = vshrl.u32 %v608, 7
    %v610 = vsub.s32 0, %v609
    %v611 = vrot.slane %v606, %v610
    %v645 = vunpack.c.l.b16 %v574
    %v646 = vunpack.c.l.b16 %v575
    %v647 = vunpack.c.l.b16 %v576
    %v648 = vunpack.c.l.b16 %v577
    %v649 = vunpack.c.l.b16 %v578
    %v650 = vunpack.c.l.b16 %v579
    %v651 = vunpack.c.l.b16 %v580
    %v652 = vunpack.c.l.b16 %v581
    %v653 = vunpack.c.l.b16 %v582
    %v654 = vunpack.c.l.b16 %v583
    %v655 = vunpack.c.l.b16 %v584
    %v656 = vunpack.c.l.b16 %v585
    %v657 = vunpack.c.l.b16 %v586
    %v658 = vunpack.c.l.b16 %v587
    %v659 = vunpack.c.l.b16 %v588
    %v660 = vunpack.c.l.b16 %v589
    %v661 = vunpack.c.l.b16 %v590
    %v662 = vunpack.c.l.b16 %v591
    %v663 = vunpack.c.l.b16 %v592
    %v664 = vunpack.c.l.b16 %v593
    %v665 = vunpack.c.l.b16 %v594
    %v666 = vunpack.c.l.b16 %v595
    %v667 = vunpack.c.l.b16 %v596
    %v668 = vunpack.c.l.b16 %v597
    %v669 = vunpack.c.l.b16 %v598
    %v670 = vunpack.c.l.b16 %v599
    %v671 = vunpack.c.l.b16 %v600
    %v672 = vunpack.c.l.b16 %v601
    %v673 = vunpack.c.l.b16 %v602
    %v674 = vunpack.c.l.b16 %v603
    %v675 = vunpack.c.l.b16 %v604
    %v676 = vunpack.c.l.b16 %v605
    %v677 = vpack.c.b16 %v646, %v645
    %v678 = vpack.c.b16 %v648, %v647
    %v679 = vpack.c.b16 %v650, %v649
    %v680 = vpack.c.b16 %v652, %v651
    %v681 = vpack.c.b16 %v654, %v653
    %v682 = vpack.c.b16 %v656, %v655
    %v683 = vpack.c.b16 %v658, %v657
    %v684 = vpack.c.b16 %v660, %v659
    %v685 = vpack.c.b16 %v662, %v661
    %v686 = vpack.c.b16 %v664, %v663
    %v687 = vpack.c.b16 %v666, %v665
    %v688 = vpack.c.b16 %v668, %v667
    %v689 = vpack.c.b16 %v670, %v669
    %v690 = vpack.c.b16 %v672, %v671
    %v691 = vpack.c.b16 %v674, %v673
    %v692 = vpack.c.b16 %v676, %v675
    %709 = vmatprep.subr.bf16.mxu0 0
    %710 = vmatpush1.bf16.msra.mxu0 %v677
    %711 = vmatprep.subr.bf16.mxu0 0
    %712 = vmatpush1.bf16.msra.mxu0 %v678
    %713 = vmatprep.subr.bf16.mxu0 0
    %714 = vmatpush1.bf16.msra.mxu0 %v679
    %715 = vmatprep.subr.bf16.mxu0 0
    %716 = vmatpush1.bf16.msra.mxu0 %v680
    %717 = vmatprep.subr.bf16.mxu0 0
    %718 = vmatpush1.bf16.msra.mxu0 %v681
    %719 = vmatprep.subr.bf16.mxu0 0
    %720 = vmatpush1.bf16.msra.mxu0 %v682
    %721 = vmatprep.subr.bf16.mxu0 0
    %722 = vmatpush1.bf16.msra.mxu0 %v683
    %723 = vmatprep.subr.bf16.mxu0 0
    %724 = vmatpush1.bf16.msra.mxu0 %v684
    %725 = vmatprep.subr.bf16.mxu0 0
    %726 = vmatpush1.bf16.msra.mxu0 %v685
    %727 = vmatprep.subr.bf16.mxu0 0
    %728 = vmatpush1.bf16.msra.mxu0 %v686
    %729 = vmatprep.subr.bf16.mxu0 0
    %730 = vmatpush1.bf16.msra.mxu0 %v687
    %731 = vmatprep.subr.bf16.mxu0 0
    %732 = vmatpush1.bf16.msra.mxu0 %v688
    %733 = vmatprep.subr.bf16.mxu0 0
    %734 = vmatpush1.bf16.msra.mxu0 %v689
    %735 = vmatprep.subr.bf16.mxu0 0
    %736 = vmatpush1.bf16.msra.mxu0 %v690
    %737 = vmatprep.subr.bf16.mxu0 0
    %738 = vmatpush1.bf16.msra.mxu0 %v691
    %739 = vmatprep.subr.bf16.mxu0 0
    %740 = vmatpush1.bf16.msra.mxu0 %v692
    %741 = vmatprep.mubr.bf16.mxu0 %v573
    %742 = vmatmul.mubr.bf16.gmra.mrb[0].mxu0 %v572
    %v743 = vpop.f32.mrb[0].mxu0
    %v744 = vadd.f32 %v611, %v743
    %v745 = vpop.f32.mrb[0].mxu0
    %v746 = vpop.f32.mrb[0].mxu0
    %v747 = vpop.f32.mrb[0].mxu0
    %748 = vdwg.mxu0
    %749 = vst [vmem:[#allocation10] sm:$0xff] %v744
    // Predicated region
    $region62: #{tpu_custom_call.1} parent=1 // pred_check
      _
    $region63: #{tpu_custom_call.1} parent=1 // pred_check_branch
      %751 = sbr.rel (0) target = $region65
    $region64: #{tpu_custom_call.1} parent=1 // pred_region
      %s753 = ssub.s32 128, 128
      %754 = vsyncadd [#allocation4], %s753
      %s756 = sshll.u32 [#allocation10], 4
      %s757 = int_to_ptr.vmem [resolvable:$true] %s756
      %759 = dma.vmem_to_hbm [thread:$0]  %s757, 128, %s11, [#allocation4]
    $region65: #{tpu_custom_call.1} parent=1 // pred_fallthru
      _
    // Predicated region
    $region66: #{tpu_custom_call.1} parent=1 // pred_check
      _
    $region67: #{tpu_custom_call.1} parent=1 // pred_check_branch
      %761 = sbr.rel (0) target = $region69
    $region68: #{tpu_custom_call.1} parent=1 // pred_region
      %762 = dma.done [#allocation4], 128
    $region69: #{tpu_custom_call.1} parent=1 // pred_fallthru
      _
    %763 = vsyncpa [#allocation3], 1
    %764 = vsyncpa [#allocation6], 1
    %765 = vsyncpa [#allocation9], 1
    %766 = vsyncpa [#allocation4], 1

</llo_original>
